<compile_context>
chip_gen: v7x
topology: tpu7x:2x2x1
jax: 0.10.0
libtpu: 0.0.40
codegen_flags: <defaults>
</compile_context>

<pallas_src>
import numpy as np
import jax
import jax.numpy as jnp
from jax.experimental import pallas as pl
from jax.experimental.pallas import tpu as pltpu


# ----------------------------------------------------------------------------
# Kernel
# ----------------------------------------------------------------------------
def _rope_kernel(cos_ref, a_ref, b_ref, x_ref, o_ref):
    """out[j] = x[j]*cos[j] + x[j+1]*a[j] + x[j-1]*b[j]   (per row).

    Block shapes:
      cos_ref, a_ref, b_ref : (1, tc)   float32, batch-shared
      x_ref, o_ref          : (tb, tc)  native / output dtype
    """
    x = x_ref[...].astype(jnp.float32)
    tc = x.shape[-1]
    # roll follows jnp.roll semantics: roll(x, s)[j] = x[(j - s) % tc]
    x_next = pltpu.roll(x, shift=tc - 1, axis=1)   # x_next[j] = x[(j + 1) % tc]
    x_prev = pltpu.roll(x, shift=1, axis=1)        # x_prev[j] = x[(j - 1) % tc]
    out = x * cos_ref[...] + x_next * a_ref[...] + x_prev * b_ref[...]
    o_ref[...] = out.astype(o_ref.dtype)


# ----------------------------------------------------------------------------
# Cached rotation tables (built once per (channel_dims, feature_dim, base))
# ----------------------------------------------------------------------------
_TABLE_CACHE = {}


def _rotation_tables(channel_dims, feature_dim, base):
    key = (tuple(channel_dims), int(feature_dim), float(base))
    hit = _TABLE_CACHE.get(key)
    if hit is not None:
        return hit

    f32 = np.float32
    n_dims = len(channel_dims)
    k_max = feature_dim // (2 * n_dims)
    theta = (1.0 / np.power(f32(base),
                            np.arange(k_max, dtype=f32) / f32(k_max))).astype(f32)
    coords = np.meshgrid(*[np.arange(d, dtype=f32) for d in channel_dims],
                         indexing="ij")
    angles = np.concatenate([c[..., None] * theta for c in coords], axis=-1)
    angles = angles.reshape(-1, feature_dim // 2).astype(f32)      # (L, D/2)
    cos = np.cos(angles).astype(f32)
    sin = np.sin(angles).astype(f32)

    L = angles.shape[0]
    cos_full = np.repeat(cos, 2, axis=-1)                          # (L, D)
    a_full = np.zeros((L, feature_dim), dtype=f32)
    b_full = np.zeros((L, feature_dim), dtype=f32)
    a_full[:, 0::2] = -sin                                         # even lanes
    b_full[:, 1::2] = sin                                          # odd lanes

    C = L * feature_dim
    tabs = (jnp.asarray(cos_full.reshape(1, C)),
            jnp.asarray(a_full.reshape(1, C)),
            jnp.asarray(b_full.reshape(1, C)))
    _TABLE_CACHE[key] = tabs
    return tabs


# ----------------------------------------------------------------------------
# Tile selection
# ----------------------------------------------------------------------------
def _largest_aligned_divisor(n, align, cap):
    """Largest multiple of `align` that divides n and is <= cap (0 if none)."""
    best = 0
    k = align
    cap = min(n, cap)
    while k <= cap:
        if n % k == 0:
            best = k
        k += align
    return best


def _pick_tiles(batch, cols, in_itemsize, out_itemsize):
    # Lane tile: multiple of 128 (lane-dense unmasked stores), dividing cols.
    tc = _largest_aligned_divisor(cols, 128, 8192)
    if tc == 0:
        tc = cols          # full-extent block is always legal (cols is even)
    # Batch tile: keep (in tile + out tile) <= ~4 MiB so double-buffered
    # in + out + tables fit default scoped VMEM on v5e/v6e/v7x.
    per_row = tc * (in_itemsize + out_itemsize)
    max_rows = max(1, (4 * 1024 * 1024) // per_row)
    if batch <= max_rows:
        tb = batch
    else:
        tb = _largest_aligned_divisor(batch, 8, max_rows)
        if tb == 0:
            tb = batch     # full-extent block is always legal
    return tb, tc


# ----------------------------------------------------------------------------
# Forward
# ----------------------------------------------------------------------------
def rope_forward(x, shape, base=10000.0, out_dtype=jnp.float32):
    """Pallas TPU implementation of RoPE.forward(x, shape).

    x         : (*batch_dims, *channel_dims, feature_dim), any float dtype.
    shape     : (*channel_dims, feature_dim)
    out_dtype : output dtype; float32 by default (matches the PyTorch module,
                which always promotes to float32).  Pass None to keep x.dtype.
    """
    shape = tuple(int(d) for d in shape)
    channel_dims, feature_dim = shape[:-1], shape[-1]
    n_dims = len(channel_dims)
    assert n_dims >= 1, "need at least one channel dim"
    assert feature_dim % (2 * n_dims) == 0, (
        "feature_dim must be divisible by 2 * len(channel_dims)")
    k_max = feature_dim // (2 * n_dims)
    assert feature_dim % k_max == 0            # original module's assert
    nd_trail = len(shape)
    assert tuple(x.shape[-nd_trail:]) == shape, (
        "x trailing dims must match `shape`")

    if out_dtype is None:
        out_dtype = x.dtype

    cos_t, a_t, b_t = _rotation_tables(channel_dims, feature_dim, base)

    batch_shape = tuple(x.shape[:-nd_trail])
    B = int(np.prod(batch_shape)) if batch_shape else 1
    L = int(np.prod(channel_dims))
    C = L * feature_dim

    x2 = x.reshape(B, C)                       # free: collapse of contiguous dims
    tb, tc = _pick_tiles(B, C, x2.dtype.itemsize, jnp.dtype(out_dtype).itemsize)
    assert tc % 2 == 0                         # keeps (re, im) pairs inside a tile
    grid = (C // tc, B // tb)                  # column tiles outer, batch inner

    out2 = pl.pallas_call(
        _rope_kernel,
        out_shape=jax.ShapeDtypeStruct((B, C), out_dtype),
        grid_spec=pltpu.PrefetchScalarGridSpec(
            num_scalar_prefetch=0,
            grid=grid,
            in_specs=[
                pl.BlockSpec((1, tc), lambda ci, bi: (0, ci)),    # cos (pair-expanded)
                pl.BlockSpec((1, tc), lambda ci, bi: (0, ci)),    # -sin on even lanes
                pl.BlockSpec((1, tc), lambda ci, bi: (0, ci)),    # +sin on odd lanes
                pl.BlockSpec((tb, tc), lambda ci, bi: (bi, ci)),  # x
            ],
            out_specs=pl.BlockSpec((tb, tc), lambda ci, bi: (bi, ci)),
        ),
        compiler_params=pltpu.CompilerParams(
            dimension_semantics=("parallel", "parallel")),
    )(cos_t, a_t, b_t, x2)

    return out2.reshape(*batch_shape, *shape)


# ----------------------------------------------------------------------------
# Pure-JAX reference (matches the PyTorch semantics, f32 math)
# ----------------------------------------------------------------------------
def rope_reference(x, shape, base=10000.0):
    channel_dims, feature_dim = tuple(shape[:-1]), int(shape[-1])
    n_dims = len(channel_dims)
    k_max = feature_dim // (2 * n_dims)
    theta_ks = 1.0 / (base ** (jnp.arange(k_max, dtype=jnp.float32) / k_max))
    coords = jnp.meshgrid(
        *[jnp.arange(d, dtype=jnp.float32) for d in channel_dims], indexing="ij")
    angles = jnp.concatenate([c[..., None] * theta_ks for c in coords], axis=-1)
    cos_t, sin_t = jnp.cos(angles), jnp.sin(angles)

    xf = x.astype(jnp.float32)
    xp = xf.reshape(*xf.shape[:-1], feature_dim // 2, 2)
    xr, xi = xp[..., 0], xp[..., 1]
    out_re = xr * cos_t - xi * sin_t
    out_im = xr * sin_t + xi * cos_t
    return jnp.stack([out_re, out_im], axis=-1).reshape(xf.shape)


if __name__ == "__main__":
    key = jax.random.PRNGKey(0)
    B, H, W, D = 2, 8, 8, 32
    shape = (H, W, D)

    # float32 path
    x = jax.random.normal(key, (B, H, W, D), dtype=jnp.float32)
    out = jax.block_until_ready(rope_forward(x, shape))
    assert out.dtype == jnp.float32 and out.shape == x.shape
    ref = rope_reference(x, shape)
    np.testing.assert_allclose(np.asarray(out), np.asarray(ref),
                               atol=1e-4, rtol=1e-4)

    # bfloat16 input, float32 output (module semantics: promote to f32)
    xb = x.astype(jnp.bfloat16)
    outb = jax.block_until_ready(rope_forward(xb, shape))
    assert outb.dtype == jnp.float32
    refb = rope_reference(xb, shape)
    np.testing.assert_allclose(np.asarray(outb), np.asarray(refb),
                               atol=3e-2, rtol=3e-2)

    # bfloat16 native-dtype I/O path (halves writeback bandwidth)
    outn = jax.block_until_ready(rope_forward(xb, shape, out_dtype=None))
    assert outn.dtype == jnp.bfloat16
    np.testing.assert_allclose(np.asarray(outn).astype(np.float32),
                               np.asarray(refb), atol=3e-2, rtol=3e-2)

    print("KERNEL_OK")
</pallas_src>

<mosaic_0001>
module attributes {stable_mosaic.version = 11 : i64} {
  func.func @_rope_kernel(%arg0: i32, %arg1: i32, %arg2: memref<1x2048xf32, #tpu.memory_space<vmem>>, %arg3: memref<1x2048xf32, #tpu.memory_space<vmem>>, %arg4: memref<1x2048xf32, #tpu.memory_space<vmem>>, %arg5: memref<2x2048xf32, #tpu.memory_space<vmem>>, %arg6: memref<2x2048xf32, #tpu.memory_space<vmem>>) attributes {dimension_semantics = [#tpu.dimension_semantics<parallel>, #tpu.dimension_semantics<parallel>], iteration_bounds = array<i64: 1, 1>, scalar_prefetch = 0 : i64, scratch_operands = 0 : i64, tpu.core_type = #tpu.core_type<tc>, window_params = [{transform_indices = @transform_0, window_bounds = array<i64: 1, 2048>}, {transform_indices = @transform_1, window_bounds = array<i64: 1, 2048>}, {transform_indices = @transform_2, window_bounds = array<i64: 1, 2048>}, {transform_indices = @transform_3, window_bounds = array<i64: 2, 2048>}, {transform_indices = @transform_4, window_bounds = array<i64: 2, 2048>}]} {
    %c0 = arith.constant 0 : index
    %c0_0 = arith.constant 0 : index
    %0 = vector.load %arg5[%c0, %c0_0] : memref<2x2048xf32, #tpu.memory_space<vmem>>, vector<2x2048xf32>
    %c2047_i32 = arith.constant 2047 : i32
    %1 = tpu.dynamic_rotate %0 by %c2047_i32 dim 1 : vector<2x2048xf32>, i32 -> vector<2x2048xf32>
    %c1_i32 = arith.constant 1 : i32
    %2 = tpu.dynamic_rotate %0 by %c1_i32 dim 1 : vector<2x2048xf32>, i32 -> vector<2x2048xf32>
    %c0_1 = arith.constant 0 : index
    %c0_2 = arith.constant 0 : index
    %3 = vector.load %arg2[%c0_1, %c0_2] : memref<1x2048xf32, #tpu.memory_space<vmem>>, vector<1x2048xf32>
    %4 = vector.broadcast %3 : vector<1x2048xf32> to vector<2x2048xf32>
    %5 = arith.mulf %0, %4 : vector<2x2048xf32>
    %c0_3 = arith.constant 0 : index
    %c0_4 = arith.constant 0 : index
    %6 = vector.load %arg3[%c0_3, %c0_4] : memref<1x2048xf32, #tpu.memory_space<vmem>>, vector<1x2048xf32>
    %7 = vector.broadcast %6 : vector<1x2048xf32> to vector<2x2048xf32>
    %8 = arith.mulf %1, %7 : vector<2x2048xf32>
    %9 = arith.addf %5, %8 : vector<2x2048xf32>
    %c0_5 = arith.constant 0 : index
    %c0_6 = arith.constant 0 : index
    %10 = vector.load %arg4[%c0_5, %c0_6] : memref<1x2048xf32, #tpu.memory_space<vmem>>, vector<1x2048xf32>
    %11 = vector.broadcast %10 : vector<1x2048xf32> to vector<2x2048xf32>
    %12 = arith.mulf %2, %11 : vector<2x2048xf32>
    %13 = arith.addf %9, %12 : vector<2x2048xf32>
    %c0_7 = arith.constant 0 : index
    %c0_8 = arith.constant 0 : index
    %14 = vector.load %arg6[%c0_7, %c0_8] : memref<2x2048xf32, #tpu.memory_space<vmem>>, vector<2x2048xf32>
    tpu.vector_store %arg6[%c0_7, %c0_8], %13 {strides = array<i32>} : memref<2x2048xf32, #tpu.memory_space<vmem>>, vector<2x2048xf32>,
    return
  }
  func.func @transform_0(%arg0: i32, %arg1: i32) -> (i32, i32) {
    %c0_i32 = arith.constant 0 : i32
    %c0_i32_0 = arith.constant 0 : i32
    return %c0_i32, %arg0 : i32, i32
  }
  func.func @transform_1(%arg0: i32, %arg1: i32) -> (i32, i32) {
    %c0_i32 = arith.constant 0 : i32
    %c0_i32_0 = arith.constant 0 : i32
    return %c0_i32, %arg0 : i32, i32
  }
  func.func @transform_2(%arg0: i32, %arg1: i32) -> (i32, i32) {
    %c0_i32 = arith.constant 0 : i32
    %c0_i32_0 = arith.constant 0 : i32
    return %c0_i32, %arg0 : i32, i32
  }
  func.func @transform_3(%arg0: i32, %arg1: i32) -> (i32, i32) {
    %c0_i32 = arith.constant 0 : i32
    return %arg1, %arg0 : i32, i32
  }
  func.func @transform_4(%arg0: i32, %arg1: i32) -> (i32, i32) {
    %c0_i32 = arith.constant 0 : i32
    return %arg1, %arg0 : i32, i32
  }
}

</mosaic_0001>

<llo_original>
// kernel: tpu_custom_call.1
$region0: #{tpu_custom_call.1}
  #allocation0 [shape = 'u32[]', space=smem, size = 0x4, offset = 0x4, fixed_abs, tag = 'smem constant byte address 0x4 - core index']
  #allocation1 [shape = 'u32[144,128]{1,0:T(1,128)}', space=vmem, size = 0x12000, scoped, tag = 'internal scratch']
  %s0 = inlined_call_operand.hbm [shape: f32[1,2048], index: 0, kind: input, shape index: {}]
  %s1 = inlined_call_operand.hbm [shape: f32[1,2048], index: 1, kind: input, shape index: {}]
  %s2 = inlined_call_operand.hbm [shape: f32[1,2048], index: 2, kind: input, shape index: {}]
  %s3 = inlined_call_operand.hbm [shape: f32[2,2048], index: 3, kind: input, shape index: {}]
  %s4 = inlined_call_operand.hbm [shape: f32[2,2048], index: 4, kind: output, shape index: {}]
  %s5 = sld [smem:[#allocation0]]
  $region42: #{tpu_custom_call.1} parent=0
    _
  %s7 = ssub.s32 1, %s5
  %s8 = scalar_select 0, %s7, %s5
  $region1: #{tpu_custom_call.1} parent=0
    #allocation2 [shape = 'u8[8192]{0}', space=vmem, size = 0x2000, scoped, tag = 'input window, operand 0, single buffered']
    #allocation3 [shape = 's32[1]{0}', space=sflag, size = 0x4, scoped, tag = 'scoped memory for tpu_custom_call.1']
    #allocation4 [shape = 's32[1]{0}', space=sflag, size = 0x4, scoped, tag = 'scoped memory for tpu_custom_call.1']
    #allocation5 [shape = 'u8[8192]{0}', space=vmem, size = 0x2000, scoped, tag = 'input window, operand 1, single buffered']
    #allocation6 [shape = 's32[1]{0}', space=sflag, size = 0x4, scoped, tag = 'scoped memory for tpu_custom_call.1']
    #allocation7 [shape = 'u8[8192]{0}', space=vmem, size = 0x2000, scoped, tag = 'input window, operand 2, single buffered']
    #allocation8 [shape = 'u8[16384]{0}', space=vmem, size = 0x4000, scoped, tag = 'input window, operand 3, single buffered']
    #allocation9 [shape = 's32[1]{0}', space=sflag, size = 0x4, scoped, tag = 'scoped memory for tpu_custom_call.1']
    #allocation10 [shape = 'u8[16384]{0}', space=vmem, size = 0x4000, scoped, tag = 'output window, operand 0, single buffered']
    %9 = vsyncpa [#allocation3], 0
    %10 = vsyncpa [#allocation6], 0
    %11 = vsyncpa [#allocation9], 0
    %12 = vsyncpa [#allocation4], 0
    // Predicated region
    $region2: #{tpu_custom_call.1} parent=1 // pred_check
      _
    $region3: #{tpu_custom_call.1} parent=1 // pred_check_branch
      %14 = sbr.rel (0) target = $region5
    $region4: #{tpu_custom_call.1} parent=1 // pred_region
      %s16 = ssub.s32 256, 256
      %17 = vsyncadd [#allocation3], %s16
      %s19 = sshll.u32 [#allocation2], 4
      %s20 = int_to_ptr.vmem [resolvable:$true] %s19
      %22 = dma.hbm_to_vmem [thread:$0]  %s0, 256, %s20, [#allocation3]
    $region5: #{tpu_custom_call.1} parent=1 // pred_fallthru
      _
    // Predicated region
    $region6: #{tpu_custom_call.1} parent=1 // pred_check
      _
    $region7: #{tpu_custom_call.1} parent=1 // pred_check_branch
      %24 = sbr.rel (0) target = $region9
    $region8: #{tpu_custom_call.1} parent=1 // pred_region
      %s26 = ssub.s32 256, 256
      %27 = vsyncadd [#allocation6], %s26
      %s29 = sshll.u32 [#allocation5], 4
      %s30 = int_to_ptr.vmem [resolvable:$true] %s29
      %32 = dma.hbm_to_vmem [thread:$0]  %s1, 256, %s30, [#allocation6]
    $region9: #{tpu_custom_call.1} parent=1 // pred_fallthru
      _
    // Predicated region
    $region10: #{tpu_custom_call.1} parent=1 // pred_check
      _
    $region11: #{tpu_custom_call.1} parent=1 // pred_check_branch
      %34 = sbr.rel (0) target = $region13
    $region12: #{tpu_custom_call.1} parent=1 // pred_region
      %s36 = ssub.s32 256, 256
      %37 = vsyncadd [#allocation6], %s36
      %s39 = sshll.u32 [#allocation7], 4
      %s40 = int_to_ptr.vmem [resolvable:$true] %s39
      %42 = dma.hbm_to_vmem [thread:$0]  %s2, 256, %s40, [#allocation6]
    $region13: #{tpu_custom_call.1} parent=1 // pred_fallthru
      _
    // Predicated region
    $region14: #{tpu_custom_call.1} parent=1 // pred_check
      _
    $region15: #{tpu_custom_call.1} parent=1 // pred_check_branch
      %44 = sbr.rel (0) target = $region17
    $region16: #{tpu_custom_call.1} parent=1 // pred_region
      %s46 = ssub.s32 512, 512
      %47 = vsyncadd [#allocation9], %s46
      %s49 = sshll.u32 [#allocation8], 4
      %s50 = int_to_ptr.vmem [resolvable:$true] %s49
      %52 = dma.hbm_to_vmem [thread:$0]  %s3, 512, %s50, [#allocation9]
    $region17: #{tpu_custom_call.1} parent=1 // pred_fallthru
      _
    // Predicated region
    $region18: #{tpu_custom_call.1} parent=1 // pred_check
      _
    $region19: #{tpu_custom_call.1} parent=1 // pred_check_branch
      %54 = sbr.rel (0) target = $region21
    $region20: #{tpu_custom_call.1} parent=1 // pred_region
      %55 = dma.done [#allocation3], 256
    $region21: #{tpu_custom_call.1} parent=1 // pred_fallthru
      _
    // Predicated region
    $region22: #{tpu_custom_call.1} parent=1 // pred_check
      _
    $region23: #{tpu_custom_call.1} parent=1 // pred_check_branch
      %57 = sbr.rel (0) target = $region25
    $region24: #{tpu_custom_call.1} parent=1 // pred_region
      %58 = dma.done [#allocation6], 256
    $region25: #{tpu_custom_call.1} parent=1 // pred_fallthru
      _
    // Predicated region
    $region26: #{tpu_custom_call.1} parent=1 // pred_check
      _
    $region27: #{tpu_custom_call.1} parent=1 // pred_check_branch
      %60 = sbr.rel (0) target = $region29
    $region28: #{tpu_custom_call.1} parent=1 // pred_region
      %61 = dma.done [#allocation6], 256
    $region29: #{tpu_custom_call.1} parent=1 // pred_fallthru
      _
    // Predicated region
    $region30: #{tpu_custom_call.1} parent=1 // pred_check
      _
    $region31: #{tpu_custom_call.1} parent=1 // pred_check_branch
      %63 = sbr.rel (0) target = $region33
    $region32: #{tpu_custom_call.1} parent=1 // pred_region
      %64 = dma.done [#allocation9], 512
    $region33: #{tpu_custom_call.1} parent=1 // pred_fallthru
      _
    %v65 = vld [vmem:[#allocation8] sm:$0xff]
    %v66 = vld [vmem:[#allocation8 + $0x8] sm:$0xff]
    %v67 = vld [vmem:[#allocation8 + $0x10] sm:$0xff]
    %v68 = vld [vmem:[#allocation8 + $0x18] sm:$0xff]
    %v73 = vcombine.high %v65, %v65
    %v75 = vunpack.c.l.s4 1983009808
    %v76 = vunpack.c.0.s8 %v75
    %v77 = vlaneseq
    %v78 = vshrl.u32 %v77, 7
    %v79 = vsub.s32 %v76, %v78
    %v80 = vrot.slane %v65, %v79
    %v82 = vunpack.c.l.s4 1983009808
    %v83 = vunpack.c.0.s8 %v82
    %v84 = vlaneseq
    %v85 = vshrl.u32 %v84, 7
    %v86 = vsub.s32 %v83, %v85
    %v87 = vrot.slane %v73, %v86
    %v88 = vcombine.high %v80, %v80
    %v89 = vcombine.high %v87, %v87
    %v90 = vcombine.high %v66, %v66
    %v92 = vunpack.c.l.s4 1983009808
    %v93 = vunpack.c.0.s8 %v92
    %v94 = vlaneseq
    %v95 = vshrl.u32 %v94, 7
    %v96 = vsub.s32 %v93, %v95
    %v97 = vrot.slane %v66, %v96
    %v99 = vunpack.c.l.s4 1983009808
    %v100 = vunpack.c.0.s8 %v99
    %v101 = vlaneseq
    %v102 = vshrl.u32 %v101, 7
    %v103 = vsub.s32 %v100, %v102
    %v104 = vrot.slane %v90, %v103
    %v105 = vcombine.high %v97, %v97
    %v106 = vcombine.high %v104, %v104
    %v107 = vcombine.high %v67, %v67
    %v109 = vunpack.c.l.s4 1983009808
    %v110 = vunpack.c.0.s8 %v109
    %v111 = vlaneseq
    %v112 = vshrl.u32 %v111, 7
    %v113 = vsub.s32 %v110, %v112
    %v114 = vrot.slane %v67, %v113
    %v116 = vunpack.c.l.s4 1983009808
    %v117 = vunpack.c.0.s8 %v116
    %v118 = vlaneseq
    %v119 = vshrl.u32 %v118, 7
    %v120 = vsub.s32 %v117, %v119
    %v121 = vrot.slane %v107, %v120
    %v122 = vcombine.high %v114, %v114
    %v123 = vcombine.high %v121, %v121
    %v124 = vcombine.high %v68, %v68
    %v126 = vunpack.c.l.s4 1983009808
    %v127 = vunpack.c.0.s8 %v126
    %v128 = vlaneseq
    %v129 = vshrl.u32 %v128, 7
    %v130 = vsub.s32 %v127, %v129
    %v131 = vrot.slane %v68, %v130
    %v133 = vunpack.c.l.s4 1983009808
    %v134 = vunpack.c.0.s8 %v133
    %v135 = vlaneseq
    %v136 = vshrl.u32 %v135, 7
    %v137 = vsub.s32 %v134, %v136
    %v138 = vrot.slane %v124, %v137
    %v139 = vcombine.high %v131, %v131
    %v140 = vcombine.high %v138, %v138
    %157 = vrot.lane.b32.xlu0 %v80, 127
    %v158 = vpop.permute.xlu0 %157
    %159 = vrot.lane.b32.xlu0 %v88, 127
    %v160 = vpop.permute.xlu0 %159
    %161 = vrot.lane.b32.xlu0 %v87, 127
    %v162 = vpop.permute.xlu0 %161
    %163 = vrot.lane.b32.xlu0 %v89, 127
    %v164 = vpop.permute.xlu0 %163
    %165 = vrot.lane.b32.xlu0 %v97, 127
    %v166 = vpop.permute.xlu0 %165
    %167 = vrot.lane.b32.xlu0 %v105, 127
    %v168 = vpop.permute.xlu0 %167
    %169 = vrot.lane.b32.xlu0 %v104, 127
    %v170 = vpop.permute.xlu0 %169
    %171 = vrot.lane.b32.xlu0 %v106, 127
    %v172 = vpop.permute.xlu0 %171
    %173 = vrot.lane.b32.xlu0 %v114, 127
    %v174 = vpop.permute.xlu0 %173
    %175 = vrot.lane.b32.xlu0 %v122, 127
    %v176 = vpop.permute.xlu0 %175
    %177 = vrot.lane.b32.xlu0 %v121, 127
    %v178 = vpop.permute.xlu0 %177
    %179 = vrot.lane.b32.xlu0 %v123, 127
    %v180 = vpop.permute.xlu0 %179
    %181 = vrot.lane.b32.xlu0 %v131, 127
    %v182 = vpop.permute.xlu0 %181
    %183 = vrot.lane.b32.xlu0 %v139, 127
    %v184 = vpop.permute.xlu0 %183
    %185 = vrot.lane.b32.xlu0 %v138, 127
    %v186 = vpop.permute.xlu0 %185
    %187 = vrot.lane.b32.xlu0 %v140, 127
    %v188 = vpop.permute.xlu0 %187
    %v189 = vlaneseq
    %v190 = vand.u32 %v189, 127
    %vm191 = vcmp.lt.s32.totalorder %v190, 127
    %v192 = vsel %vm191, %v186, %v188
    %v193 = vsel %vm191, %v184, %v186
    %v194 = vsel %vm191, %v182, %v184
    %v195 = vsel %vm191, %v180, %v182
    %v196 = vsel %vm191, %v178, %v180
    %v197 = vsel %vm191, %v176, %v178
    %v198 = vsel %vm191, %v174, %v176
    %v199 = vsel %vm191, %v172, %v174
    %v200 = vsel %vm191, %v170, %v172
    %v201 = vsel %vm191, %v168, %v170
    %v202 = vsel %vm191, %v166, %v168
    %v203 = vsel %vm191, %v164, %v166
    %v204 = vsel %vm191, %v162, %v164
    %v205 = vsel %vm191, %v160, %v162
    %v206 = vsel %vm191, %v158, %v160
    %v207 = vsel %vm191, %v188, %v158
    %208 = vrot.lane.b32.xlu0 %v80, 1
    %v209 = vpop.permute.xlu0 %208
    %210 = vrot.lane.b32.xlu0 %v88, 1
    %v211 = vpop.permute.xlu0 %210
    %212 = vrot.lane.b32.xlu0 %v87, 1
    %v213 = vpop.permute.xlu0 %212
    %214 = vrot.lane.b32.xlu0 %v89, 1
    %v215 = vpop.permute.xlu0 %214
    %216 = vrot.lane.b32.xlu0 %v97, 1
    %v217 = vpop.permute.xlu0 %216
    %218 = vrot.lane.b32.xlu0 %v105, 1
    %v219 = vpop.permute.xlu0 %218
    %220 = vrot.lane.b32.xlu0 %v104, 1
    %v221 = vpop.permute.xlu0 %220
    %222 = vrot.lane.b32.xlu0 %v106, 1
    %v223 = vpop.permute.xlu0 %222
    %224 = vrot.lane.b32.xlu0 %v114, 1
    %v225 = vpop.permute.xlu0 %224
    %226 = vrot.lane.b32.xlu0 %v122, 1
    %v227 = vpop.permute.xlu0 %226
    %228 = vrot.lane.b32.xlu0 %v121, 1
    %v229 = vpop.permute.xlu0 %228
    %230 = vrot.lane.b32.xlu0 %v123, 1
    %v231 = vpop.permute.xlu0 %230
    %232 = vrot.lane.b32.xlu0 %v131, 1
    %v233 = vpop.permute.xlu0 %232
    %234 = vrot.lane.b32.xlu0 %v139, 1
    %v235 = vpop.permute.xlu0 %234
    %236 = vrot.lane.b32.xlu0 %v138, 1
    %v237 = vpop.permute.xlu0 %236
    %238 = vrot.lane.b32.xlu0 %v140, 1
    %v239 = vpop.permute.xlu0 %238
    %vm240 = vcmp.lt.s32.totalorder %v190, 1
    %v241 = vsel %vm240, %v237, %v239
    %v242 = vsel %vm240, %v235, %v237
    %v243 = vsel %vm240, %v233, %v235
    %v244 = vsel %vm240, %v231, %v233
    %v245 = vsel %vm240, %v229, %v231
    %v246 = vsel %vm240, %v227, %v229
    %v247 = vsel %vm240, %v225, %v227
    %v248 = vsel %vm240, %v223, %v225
    %v249 = vsel %vm240, %v221, %v223
    %v250 = vsel %vm240, %v219, %v221
    %v251 = vsel %vm240, %v217, %v219
    %v252 = vsel %vm240, %v215, %v217
    %v253 = vsel %vm240, %v213, %v215
    %v254 = vsel %vm240, %v211, %v213
    %v255 = vsel %vm240, %v209, %v211
    %v256 = vsel %vm240, %v239, %v209
    %v257 = vld [vmem:[#allocation2] sm:$0xff]
    %v258 = vld [vmem:[#allocation2 + $0x8] sm:$0xff]
    %v261 = vlaneseq
    %v262 = vshrl.u32 %v261, 7
    %v263 = vsub.s32 0, %v262
    %v264 = vrot.slane %v257, %v263
    %v265 = vlaneseq
    %v266 = vshrl.u32 %v265, 7
    %v267 = vsub.s32 1, %v266
    %v268 = vrot.slane %v257, %v267
    %v269 = vlaneseq
    %v270 = vshrl.u32 %v269, 7
    %v271 = vsub.s32 2, %v270
    %v272 = vrot.slane %v257, %v271
    %v273 = vlaneseq
    %v274 = vshrl.u32 %v273, 7
    %v275 = vsub.s32 3, %v274
    %v276 = vrot.slane %v257, %v275
    %v277 = vlaneseq
    %v278 = vshrl.u32 %v277, 7
    %v279 = vsub.s32 4, %v278
    %v280 = vrot.slane %v257, %v279
    %v281 = vlaneseq
    %v282 = vshrl.u32 %v281, 7
    %v283 = vsub.s32 5, %v282
    %v284 = vrot.slane %v257, %v283
    %v285 = vlaneseq
    %v286 = vshrl.u32 %v285, 7
    %v287 = vsub.s32 6, %v286
    %v288 = vrot.slane %v257, %v287
    %v289 = vlaneseq
    %v290 = vshrl.u32 %v289, 7
    %v291 = vsub.s32 7, %v290
    %v292 = vrot.slane %v257, %v291
    %v293 = vlaneseq
    %v294 = vshrl.u32 %v293, 7
    %v295 = vsub.s32 0, %v294
    %v296 = vrot.slane %v258, %v295
    %v297 = vlaneseq
    %v298 = vshrl.u32 %v297, 7
    %v299 = vsub.s32 1, %v298
    %v300 = vrot.slane %v258, %v299
    %v301 = vlaneseq
    %v302 = vshrl.u32 %v301, 7
    %v303 = vsub.s32 2, %v302
    %v304 = vrot.slane %v258, %v303
    %v305 = vlaneseq
    %v306 = vshrl.u32 %v305, 7
    %v307 = vsub.s32 3, %v306
    %v308 = vrot.slane %v258, %v307
    %v309 = vlaneseq
    %v310 = vshrl.u32 %v309, 7
    %v311 = vsub.s32 4, %v310
    %v312 = vrot.slane %v258, %v311
    %v313 = vlaneseq
    %v314 = vshrl.u32 %v313, 7
    %v315 = vsub.s32 5, %v314
    %v316 = vrot.slane %v258, %v315
    %v317 = vlaneseq
    %v318 = vshrl.u32 %v317, 7
    %v319 = vsub.s32 6, %v318
    %v320 = vrot.slane %v258, %v319
    %v321 = vlaneseq
    %v322 = vshrl.u32 %v321, 7
    %v323 = vsub.s32 7, %v322
    %v324 = vrot.slane %v258, %v323
    %v325 = vcombine.low %v264, %v268
    %v326 = vcombine.low %v272, %v276
    %v328 = vunpack.c.l.s4 1983009808
    %v329 = vunpack.c.0.s8 %v328
    %v330 = vlaneseq
    %v331 = vshrl.u32 %v330, 7
    %v332 = vsub.s32 %v329, %v331
    %v333 = vrot.slane %v325, %v332
    %v335 = vunpack.c.l.s4 1983009808
    %v336 = vunpack.c.0.s8 %v335
    %v337 = vlaneseq
    %v338 = vshrl.u32 %v337, 7
    %v339 = vsub.s32 %v336, %v338
    %v340 = vrot.slane %v326, %v339
    %v341 = vcombine.low %v333, %v340
    %v342 = vcombine.low %v280, %v284
    %v343 = vcombine.low %v288, %v292
    %v345 = vunpack.c.l.s4 1983009808
    %v346 = vunpack.c.0.s8 %v345
    %v347 = vlaneseq
    %v348 = vshrl.u32 %v347, 7
    %v349 = vsub.s32 %v346, %v348
    %v350 = vrot.slane %v342, %v349
    %v352 = vunpack.c.l.s4 1983009808
    %v353 = vunpack.c.0.s8 %v352
    %v354 = vlaneseq
    %v355 = vshrl.u32 %v354, 7
    %v356 = vsub.s32 %v353, %v355
    %v357 = vrot.slane %v343, %v356
    %v358 = vcombine.low %v350, %v357
    %v359 = vcombine.low %v296, %v300
    %v360 = vcombine.low %v304, %v308
    %v362 = vunpack.c.l.s4 1983009808
    %v363 = vunpack.c.0.s8 %v362
    %v364 = vlaneseq
    %v365 = vshrl.u32 %v364, 7
    %v366 = vsub.s32 %v363, %v365
    %v367 = vrot.slane %v359, %v366
    %v369 = vunpack.c.l.s4 1983009808
    %v370 = vunpack.c.0.s8 %v369
    %v371 = vlaneseq
    %v372 = vshrl.u32 %v371, 7
    %v373 = vsub.s32 %v370, %v372
    %v374 = vrot.slane %v360, %v373
    %v375 = vcombine.low %v367, %v374
    %v376 = vcombine.low %v312, %v316
    %v377 = vcombine.low %v320, %v324
    %v379 = vunpack.c.l.s4 1983009808
    %v380 = vunpack.c.0.s8 %v379
    %v381 = vlaneseq
    %v382 = vshrl.u32 %v381, 7
    %v383 = vsub.s32 %v380, %v382
    %v384 = vrot.slane %v376, %v383
    %v386 = vunpack.c.l.s4 1983009808
    %v387 = vunpack.c.0.s8 %v386
    %v388 = vlaneseq
    %v389 = vshrl.u32 %v388, 7
    %v390 = vsub.s32 %v387, %v389
    %v391 = vrot.slane %v377, %v390
    %v392 = vcombine.low %v384, %v391
    %v397 = vmul.f32 %v65, %v341
    %v398 = vmul.f32 %v66, %v358
    %v399 = vmul.f32 %v67, %v375
    %v400 = vmul.f32 %v68, %v392
    %v401 = vld [vmem:[#allocation5] sm:$0xff]
    %v402 = vld [vmem:[#allocation5 + $0x8] sm:$0xff]
    %v405 = vlaneseq
    %v406 = vshrl.u32 %v405, 7
    %v407 = vsub.s32 0, %v406
    %v408 = vrot.slane %v401, %v407
    %v409 = vlaneseq
    %v410 = vshrl.u32 %v409, 7
    %v411 = vsub.s32 1, %v410
    %v412 = vrot.slane %v401, %v411
    %v413 = vlaneseq
    %v414 = vshrl.u32 %v413, 7
    %v415 = vsub.s32 2, %v414
    %v416 = vrot.slane %v401, %v415
    %v417 = vlaneseq
    %v418 = vshrl.u32 %v417, 7
    %v419 = vsub.s32 3, %v418
    %v420 = vrot.slane %v401, %v419
    %v421 = vlaneseq
    %v422 = vshrl.u32 %v421, 7
    %v423 = vsub.s32 4, %v422
    %v424 = vrot.slane %v401, %v423
    %v425 = vlaneseq
    %v426 = vshrl.u32 %v425, 7
    %v427 = vsub.s32 5, %v426
    %v428 = vrot.slane %v401, %v427
    %v429 = vlaneseq
    %v430 = vshrl.u32 %v429, 7
    %v431 = vsub.s32 6, %v430
    %v432 = vrot.slane %v401, %v431
    %v433 = vlaneseq
    %v434 = vshrl.u32 %v433, 7
    %v435 = vsub.s32 7, %v434
    %v436 = vrot.slane %v401, %v435
    %v437 = vlaneseq
    %v438 = vshrl.u32 %v437, 7
    %v439 = vsub.s32 0, %v438
    %v440 = vrot.slane %v402, %v439
    %v441 = vlaneseq
    %v442 = vshrl.u32 %v441, 7
    %v443 = vsub.s32 1, %v442
    %v444 = vrot.slane %v402, %v443
    %v445 = vlaneseq
    %v446 = vshrl.u32 %v445, 7
    %v447 = vsub.s32 2, %v446
    %v448 = vrot.slane %v402, %v447
    %v449 = vlaneseq
    %v450 = vshrl.u32 %v449, 7
    %v451 = vsub.s32 3, %v450
    %v452 = vrot.slane %v402, %v451
    %v453 = vlaneseq
    %v454 = vshrl.u32 %v453, 7
    %v455 = vsub.s32 4, %v454
    %v456 = vrot.slane %v402, %v455
    %v457 = vlaneseq
    %v458 = vshrl.u32 %v457, 7
    %v459 = vsub.s32 5, %v458
    %v460 = vrot.slane %v402, %v459
    %v461 = vlaneseq
    %v462 = vshrl.u32 %v461, 7
    %v463 = vsub.s32 6, %v462
    %v464 = vrot.slane %v402, %v463
    %v465 = vlaneseq
    %v466 = vshrl.u32 %v465, 7
    %v467 = vsub.s32 7, %v466
    %v468 = vrot.slane %v402, %v467
    %v485 = vmul.f32 %v206, %v408
    %v486 = vmul.f32 %v205, %v412
    %v487 = vmul.f32 %v204, %v416
    %v488 = vmul.f32 %v203, %v420
    %v489 = vmul.f32 %v202, %v424
    %v490 = vmul.f32 %v201, %v428
    %v491 = vmul.f32 %v200, %v432
    %v492 = vmul.f32 %v199, %v436
    %v493 = vmul.f32 %v198, %v440
    %v494 = vmul.f32 %v197, %v444
    %v495 = vmul.f32 %v196, %v448
    %v496 = vmul.f32 %v195, %v452
    %v497 = vmul.f32 %v194, %v456
    %v498 = vmul.f32 %v193, %v460
    %v499 = vmul.f32 %v192, %v464
    %v500 = vmul.f32 %v207, %v468
    %v517 = vcombine.low %v485, %v486
    %v518 = vcombine.low %v487, %v488
    %v520 = vunpack.c.l.s4 1983009808
    %v521 = vunpack.c.0.s8 %v520
    %v522 = vlaneseq
    %v523 = vshrl.u32 %v522, 7
    %v524 = vsub.s32 %v521, %v523
    %v525 = vrot.slane %v517, %v524
    %v527 = vunpack.c.l.s4 1983009808
    %v528 = vunpack.c.0.s8 %v527
    %v529 = vlaneseq
    %v530 = vshrl.u32 %v529, 7
    %v531 = vsub.s32 %v528, %v530
    %v532 = vrot.slane %v518, %v531
    %v533 = vcombine.low %v525, %v532
    %v534 = vcombine.low %v489, %v490
    %v535 = vcombine.low %v491, %v492
    %v537 = vunpack.c.l.s4 1983009808
    %v538 = vunpack.c.0.s8 %v537
    %v539 = vlaneseq
    %v540 = vshrl.u32 %v539, 7
    %v541 = vsub.s32 %v538, %v540
    %v542 = vrot.slane %v534, %v541
    %v544 = vunpack.c.l.s4 1983009808
    %v545 = vunpack.c.0.s8 %v544
    %v546 = vlaneseq
    %v547 = vshrl.u32 %v546, 7
    %v548 = vsub.s32 %v545, %v547
    %v549 = vrot.slane %v535, %v548
    %v550 = vcombine.low %v542, %v549
    %v551 = vcombine.low %v493, %v494
    %v552 = vcombine.low %v495, %v496
    %v554 = vunpack.c.l.s4 1983009808
    %v555 = vunpack.c.0.s8 %v554
    %v556 = vlaneseq
    %v557 = vshrl.u32 %v556, 7
    %v558 = vsub.s32 %v555, %v557
    %v559 = vrot.slane %v551, %v558
    %v561 = vunpack.c.l.s4 1983009808
    %v562 = vunpack.c.0.s8 %v561
    %v563 = vlaneseq
    %v564 = vshrl.u32 %v563, 7
    %v565 = vsub.s32 %v562, %v564
    %v566 = vrot.slane %v552, %v565
    %v567 = vcombine.low %v559, %v566
    %v568 = vcombine.low %v497, %v498
    %v569 = vcombine.low %v499, %v500
    %v571 = vunpack.c.l.s4 1983009808
    %v572 = vunpack.c.0.s8 %v571
    %v573 = vlaneseq
    %v574 = vshrl.u32 %v573, 7
    %v575 = vsub.s32 %v572, %v574
    %v576 = vrot.slane %v568, %v575
    %v578 = vunpack.c.l.s4 1983009808
    %v579 = vunpack.c.0.s8 %v578
    %v580 = vlaneseq
    %v581 = vshrl.u32 %v580, 7
    %v582 = vsub.s32 %v579, %v581
    %v583 = vrot.slane %v569, %v582
    %v584 = vcombine.low %v576, %v583
    %v589 = vadd.f32 %v397, %v533
    %v590 = vadd.f32 %v398, %v550
    %v591 = vadd.f32 %v399, %v567
    %v592 = vadd.f32 %v400, %v584
    %v593 = vld [vmem:[#allocation7] sm:$0xff]
    %v594 = vld [vmem:[#allocation7 + $0x8] sm:$0xff]
    %v597 = vlaneseq
    %v598 = vshrl.u32 %v597, 7
    %v599 = vsub.s32 0, %v598
    %v600 = vrot.slane %v593, %v599
    %v601 = vlaneseq
    %v602 = vshrl.u32 %v601, 7
    %v603 = vsub.s32 1, %v602
    %v604 = vrot.slane %v593, %v603
    %v605 = vlaneseq
    %v606 = vshrl.u32 %v605, 7
    %v607 = vsub.s32 2, %v606
    %v608 = vrot.slane %v593, %v607
    %v609 = vlaneseq
    %v610 = vshrl.u32 %v609, 7
    %v611 = vsub.s32 3, %v610
    %v612 = vrot.slane %v593, %v611
    %v613 = vlaneseq
    %v614 = vshrl.u32 %v613, 7
    %v615 = vsub.s32 4, %v614
    %v616 = vrot.slane %v593, %v615
    %v617 = vlaneseq
    %v618 = vshrl.u32 %v617, 7
    %v619 = vsub.s32 5, %v618
    %v620 = vrot.slane %v593, %v619
    %v621 = vlaneseq
    %v622 = vshrl.u32 %v621, 7
    %v623 = vsub.s32 6, %v622
    %v624 = vrot.slane %v593, %v623
    %v625 = vlaneseq
    %v626 = vshrl.u32 %v625, 7
    %v627 = vsub.s32 7, %v626
    %v628 = vrot.slane %v593, %v627
    %v629 = vlaneseq
    %v630 = vshrl.u32 %v629, 7
    %v631 = vsub.s32 0, %v630
    %v632 = vrot.slane %v594, %v631
    %v633 = vlaneseq
    %v634 = vshrl.u32 %v633, 7
    %v635 = vsub.s32 1, %v634
    %v636 = vrot.slane %v594, %v635
    %v637 = vlaneseq
    %v638 = vshrl.u32 %v637, 7
    %v639 = vsub.s32 2, %v638
    %v640 = vrot.slane %v594, %v639
    %v641 = vlaneseq
    %v642 = vshrl.u32 %v641, 7
    %v643 = vsub.s32 3, %v642
    %v644 = vrot.slane %v594, %v643
    %v645 = vlaneseq
    %v646 = vshrl.u32 %v645, 7
    %v647 = vsub.s32 4, %v646
    %v648 = vrot.slane %v594, %v647
    %v649 = vlaneseq
    %v650 = vshrl.u32 %v649, 7
    %v651 = vsub.s32 5, %v650
    %v652 = vrot.slane %v594, %v651
    %v653 = vlaneseq
    %v654 = vshrl.u32 %v653, 7
    %v655 = vsub.s32 6, %v654
    %v656 = vrot.slane %v594, %v655
    %v657 = vlaneseq
    %v658 = vshrl.u32 %v657, 7
    %v659 = vsub.s32 7, %v658
    %v660 = vrot.slane %v594, %v659
    %v677 = vmul.f32 %v256, %v600
    %v678 = vmul.f32 %v255, %v604
    %v679 = vmul.f32 %v254, %v608
    %v680 = vmul.f32 %v253, %v612
    %v681 = vmul.f32 %v252, %v616
    %v682 = vmul.f32 %v251, %v620
    %v683 = vmul.f32 %v250, %v624
    %v684 = vmul.f32 %v249, %v628
    %v685 = vmul.f32 %v248, %v632
    %v686 = vmul.f32 %v247, %v636
    %v687 = vmul.f32 %v246, %v640
    %v688 = vmul.f32 %v245, %v644
    %v689 = vmul.f32 %v244, %v648
    %v690 = vmul.f32 %v243, %v652
    %v691 = vmul.f32 %v242, %v656
    %v692 = vmul.f32 %v241, %v660
    %v709 = vcombine.low %v677, %v678
    %v710 = vcombine.low %v679, %v680
    %v712 = vunpack.c.l.s4 1983009808
    %v713 = vunpack.c.0.s8 %v712
    %v714 = vlaneseq
    %v715 = vshrl.u32 %v714, 7
    %v716 = vsub.s32 %v713, %v715
    %v717 = vrot.slane %v709, %v716
    %v719 = vunpack.c.l.s4 1983009808
    %v720 = vunpack.c.0.s8 %v719
    %v721 = vlaneseq
    %v722 = vshrl.u32 %v721, 7
    %v723 = vsub.s32 %v720, %v722
    %v724 = vrot.slane %v710, %v723
    %v725 = vcombine.low %v717, %v724
    %v726 = vcombine.low %v681, %v682
    %v727 = vcombine.low %v683, %v684
    %v729 = vunpack.c.l.s4 1983009808
    %v730 = vunpack.c.0.s8 %v729
    %v731 = vlaneseq
    %v732 = vshrl.u32 %v731, 7
    %v733 = vsub.s32 %v730, %v732
    %v734 = vrot.slane %v726, %v733
    %v736 = vunpack.c.l.s4 1983009808
    %v737 = vunpack.c.0.s8 %v736
    %v738 = vlaneseq
    %v739 = vshrl.u32 %v738, 7
    %v740 = vsub.s32 %v737, %v739
    %v741 = vrot.slane %v727, %v740
    %v742 = vcombine.low %v734, %v741
    %v743 = vcombine.low %v685, %v686
    %v744 = vcombine.low %v687, %v688
    %v746 = vunpack.c.l.s4 1983009808
    %v747 = vunpack.c.0.s8 %v746
    %v748 = vlaneseq
    %v749 = vshrl.u32 %v748, 7
    %v750 = vsub.s32 %v747, %v749
    %v751 = vrot.slane %v743, %v750
    %v753 = vunpack.c.l.s4 1983009808
    %v754 = vunpack.c.0.s8 %v753
    %v755 = vlaneseq
    %v756 = vshrl.u32 %v755, 7
    %v757 = vsub.s32 %v754, %v756
    %v758 = vrot.slane %v744, %v757
    %v759 = vcombine.low %v751, %v758
    %v760 = vcombine.low %v689, %v690
    %v761 = vcombine.low %v691, %v692
    %v763 = vunpack.c.l.s4 1983009808
    %v764 = vunpack.c.0.s8 %v763
    %v765 = vlaneseq
    %v766 = vshrl.u32 %v765, 7
    %v767 = vsub.s32 %v764, %v766
    %v768 = vrot.slane %v760, %v767
    %v770 = vunpack.c.l.s4 1983009808
    %v771 = vunpack.c.0.s8 %v770
    %v772 = vlaneseq
    %v773 = vshrl.u32 %v772, 7
    %v774 = vsub.s32 %v771, %v773
    %v775 = vrot.slane %v761, %v774
    %v776 = vcombine.low %v768, %v775
    %v781 = vadd.f32 %v589, %v725
    %v782 = vadd.f32 %v590, %v742
    %v783 = vadd.f32 %v591, %v759
    %v784 = vadd.f32 %v592, %v776
    %785 = vst [vmem:[#allocation10] sm:$0xff] %v781
    %786 = vst [vmem:[#allocation10 + $0x8] sm:$0xff] %v782
    %787 = vst [vmem:[#allocation10 + $0x10] sm:$0xff] %v783
    %788 = vst [vmem:[#allocation10 + $0x18] sm:$0xff] %v784
    // Predicated region
    $region34: #{tpu_custom_call.1} parent=1 // pred_check
      _
    $region35: #{tpu_custom_call.1} parent=1 // pred_check_branch
      %790 = sbr.rel (0) target = $region37
    $region36: #{tpu_custom_call.1} parent=1 // pred_region
      %s792 = ssub.s32 512, 512
      %793 = vsyncadd [#allocation4], %s792
      %s795 = sshll.u32 [#allocation10], 4
      %s796 = int_to_ptr.vmem [resolvable:$true] %s795
      %798 = dma.vmem_to_hbm [thread:$0]  %s796, 512, %s4, [#allocation4]
    $region37: #{tpu_custom_call.1} parent=1 // pred_fallthru
      _
    // Predicated region
    $region38: #{tpu_custom_call.1} parent=1 // pred_check
      _
    $region39: #{tpu_custom_call.1} parent=1 // pred_check_branch
      %800 = sbr.rel (0) target = $region41
    $region40: #{tpu_custom_call.1} parent=1 // pred_region
      %801 = dma.done [#allocation4], 512
    $region41: #{tpu_custom_call.1} parent=1 // pred_fallthru
      _
    %802 = vsyncpa [#allocation3], 1
    %803 = vsyncpa [#allocation6], 1
    %804 = vsyncpa [#allocation9], 1
    %805 = vsyncpa [#allocation4], 1

</llo_original>
